<compile_context>
chip_gen: v6e
topology: v6e:2x2x1
jax: 0.10.0
libtpu: 0.0.40
codegen_flags: <defaults>
</compile_context>

<pallas_src>
import functools

import jax
import jax.numpy as jnp
from jax.experimental import pallas as pl
from jax.experimental.pallas import tpu as pltpu


def _make_shuffle_kernel(factor, tw, lane_align):
    """Kernel: copy the row-permuted (B_blk, th, W) tile, shuffling column
    blocks on the fly with lane-axis slice copies."""

    def kernel(row_perm_ref, col_perm_ref, x_ref, o_ref):
        del row_perm_ref  # consumed by the input index_map
        # Unrolled static loop over column blocks: output column block j is
        # sourced from input column block col_perm[j].
        for j in range(factor):
            src_start = pl.multiple_of(col_perm_ref[j] * tw, lane_align)
            o_ref[:, :, j * tw:(j + 1) * tw] = x_ref[:, :, pl.ds(src_start, tw)]

    return kernel


def _pick_batch_block(B, th, W, itemsize, budget_bytes=4 * 1024 * 1024):
    """Largest divisor of B whose (B_blk, th, W) block stays under budget."""
    per_batch_bytes = th * W * itemsize
    max_b = max(1, budget_bytes // max(per_batch_bytes, 1))
    b_blk = 1
    for d in range(1, B + 1):
        if B % d == 0 and d <= max_b:
            b_blk = d
    return b_blk


# Sublane quantum per itemsize (f32 -> 8, bf16 -> 16, int8/u8 -> 32).
_SUBLANE_QUANTUM = {4: 8, 2: 16, 1: 32}


def shuffle_patches(img, row_perm, col_perm, factor):
    """Pallas implementation of ShufflePatches.forward.

    img:      (B, H, W) array, H and W divisible by `factor`
    row_perm: (factor,) int32 permutation applied to row blocks
    col_perm: (factor,) int32 permutation applied to column blocks
    """
    B, H, W = img.shape
    assert H % factor == 0 and W % factor == 0, "H, W must be divisible by factor"
    th, tw = H // factor, W // factor

    itemsize = jnp.dtype(img.dtype).itemsize
    sublane = _SUBLANE_QUANTUM.get(itemsize, 8)
    # Row-block height must be sublane-aligned (or the full H) so the
    # (B_blk, th, W) block satisfies TPU tiling; W is full-extent -> lane ok.
    assert th % sublane == 0 or th == H, (
        f"H//factor={th} must be a multiple of {sublane} for dtype {img.dtype}")

    b_blk = _pick_batch_block(B, th, W, itemsize)
    # Alignment hint for the dynamic lane-axis source offset.
    lane_align = 128 if tw % 128 == 0 else tw

    kernel = _make_shuffle_kernel(factor, tw, lane_align)

    grid_spec = pltpu.PrefetchScalarGridSpec(
        num_scalar_prefetch=2,
        grid=(B // b_blk, factor),
        in_specs=[
            pl.BlockSpec(
                (b_blk, th, W),
                # output row block i is sourced from input row block rp[i];
                # full W is loaded, column shuffle happens in the body.
                lambda b, i, rp, cp: (b, rp[i], 0),
            )
        ],
        out_specs=pl.BlockSpec(
            (b_blk, th, W),
            lambda b, i, rp, cp: (b, i, 0),
        ),
    )

    cost = pl.CostEstimate(
        flops=0,
        transcendentals=0,
        bytes_accessed=2 * B * H * W * itemsize,
    )

    return pl.pallas_call(
        kernel,
        out_shape=jax.ShapeDtypeStruct((B, H, W), img.dtype),
        grid_spec=grid_spec,
        compiler_params=pltpu.CompilerParams(
            dimension_semantics=("parallel", "parallel"),
        ),
        cost_estimate=cost,
    )(row_perm, col_perm, img)


def shuffle_patches_ref(img, row_perm, col_perm, factor):
    """Pure-JAX reference with identical semantics (for verification)."""
    B, H, W = img.shape
    th, tw = H // factor, W // factor
    x = img.reshape(B, factor, th, factor, tw)
    x = x[:, row_perm]          # out row-block i = in row-block row_perm[i]
    x = x[:, :, :, col_perm]    # out col-block j = in col-block col_perm[j]
    return x.reshape(B, H, W)


if __name__ == "__main__":
    factor = 2
    # Small demo shape: block is (B_blk, H//factor, W) = (2, 8, 256):
    # sublane-aligned rows, full-W lane-dense output.
    B, H, W = 2, 16, 256

    key = jax.random.PRNGKey(0)
    k_img, k_row, k_col = jax.random.split(key, 3)

    img = jax.random.normal(k_img, (B, H, W), dtype=jnp.float32)
    # Deterministic stand-ins for the module's random.shuffle permutations.
    row_perm = jax.random.permutation(k_row, factor).astype(jnp.int32)
    col_perm = jax.random.permutation(k_col, factor).astype(jnp.int32)

    out = shuffle_patches(img, row_perm, col_perm, factor)
    out = jax.block_until_ready(out)

    ref = shuffle_patches_ref(img, row_perm, col_perm, factor)
    assert out.shape == (B, H, W) and out.dtype == img.dtype
    assert jnp.array_equal(out, ref), "Pallas output mismatch vs reference"

    print("KERNEL_OK")
</pallas_src>

<mosaic_0001>
module attributes {stable_mosaic.version = 11 : i64} {
  func.func @kernel(%arg0: i32, %arg1: i32, %arg2: memref<2xi32, #tpu.memory_space<smem>>, %arg3: memref<2xi32, #tpu.memory_space<smem>>, %arg4: memref<2x8x256xf32, #tpu.memory_space<vmem>>, %arg5: memref<2x8x256xf32, #tpu.memory_space<vmem>>) attributes {dimension_semantics = [#tpu.dimension_semantics<parallel>, #tpu.dimension_semantics<parallel>], iteration_bounds = array<i64: 1, 2>, scalar_prefetch = 2 : i64, scratch_operands = 0 : i64, tpu.core_type = #tpu.core_type<tc>, window_params = [{transform_indices = @transform_0, window_bounds = array<i64: 2, 8, 256>}, {transform_indices = @transform_1, window_bounds = array<i64: 2, 8, 256>}]} {
    %c0 = arith.constant 0 : index
    %0 = memref.load %arg3[%c0] : memref<2xi32, #tpu.memory_space<smem>>
    %c128_i32 = arith.constant 128 : i32
    %1 = arith.muli %0, %c128_i32 : i32
    %2 = tpu.assume_multiple %1, 128 : i32
    %c0_0 = arith.constant 0 : index
    %c0_1 = arith.constant 0 : index
    %3 = arith.index_cast %2 : i32 to index
    %4 = vector.load %arg4[%c0_0, %c0_1, %3] : memref<2x8x256xf32, #tpu.memory_space<vmem>>, vector<2x8x128xf32>
    %c0_2 = arith.constant 0 : index
    %c0_3 = arith.constant 0 : index
    %c0_4 = arith.constant 0 : index
    %5 = vector.load %arg5[%c0_2, %c0_3, %c0_4] : memref<2x8x256xf32, #tpu.memory_space<vmem>>, vector<2x8x128xf32>
    tpu.vector_store %arg5[%c0_2, %c0_3, %c0_4], %4 {strides = array<i32>} : memref<2x8x256xf32, #tpu.memory_space<vmem>>, vector<2x8x128xf32>,
    %c1 = arith.constant 1 : index
    %6 = memref.load %arg3[%c1] : memref<2xi32, #tpu.memory_space<smem>>
    %c128_i32_5 = arith.constant 128 : i32
    %7 = arith.muli %6, %c128_i32_5 : i32
    %8 = tpu.assume_multiple %7, 128 : i32
    %c0_6 = arith.constant 0 : index
    %c0_7 = arith.constant 0 : index
    %9 = arith.index_cast %8 : i32 to index
    %10 = vector.load %arg4[%c0_6, %c0_7, %9] : memref<2x8x256xf32, #tpu.memory_space<vmem>>, vector<2x8x128xf32>
    %c0_8 = arith.constant 0 : index
    %c0_9 = arith.constant 0 : index
    %c128 = arith.constant 128 : index
    %11 = vector.load %arg5[%c0_8, %c0_9, %c128] : memref<2x8x256xf32, #tpu.memory_space<vmem>>, vector<2x8x128xf32>
    tpu.vector_store %arg5[%c0_8, %c0_9, %c128], %10 {strides = array<i32>} : memref<2x8x256xf32, #tpu.memory_space<vmem>>, vector<2x8x128xf32>,
    return
  }
  func.func @transform_0(%arg0: i32, %arg1: i32, %arg2: memref<2xi32, #tpu.memory_space<smem>>, %arg3: memref<2xi32, #tpu.memory_space<smem>>) -> (i32, i32, i32) {
    %0 = arith.index_cast %arg1 : i32 to index
    %1 = memref.load %arg2[%0] : memref<2xi32, #tpu.memory_space<smem>>
    %c0_i32 = arith.constant 0 : i32
    %c0_i32_0 = arith.constant 0 : i32
    return %arg0, %1, %c0_i32 : i32, i32, i32
  }
  func.func @transform_1(%arg0: i32, %arg1: i32, %arg2: memref<2xi32, #tpu.memory_space<smem>>, %arg3: memref<2xi32, #tpu.memory_space<smem>>) -> (i32, i32, i32) {
    %c0_i32 = arith.constant 0 : i32
    %c0_i32_0 = arith.constant 0 : i32
    return %arg0, %arg1, %c0_i32 : i32, i32, i32
  }
}

</mosaic_0001>

<llo_original>
// kernel: tpu_custom_call.1
$region0: #{tpu_custom_call.1}
  #allocation0 [shape = 'u32[]', space=smem, size = 0x4, offset = 0x4, fixed_abs, tag = 'smem constant byte address 0x4 - core index']
  #allocation1 [shape = 'u32[144,128]{1,0:T(1,128)}', space=vmem, size = 0x12000, scoped, tag = 'internal scratch']
  #allocation2 [shape = 's32[1]{0}', space=sflag, size = 0x4, scoped, tag = 'scoped memory for tpu_custom_call.1']
  #allocation3 [shape = 'u8[512]{0}', space=smem, size = 0x200, scoped, tag = 'prefetched SMEM operand 0']
  #allocation4 [shape = 'u8[512]{0}', space=smem, size = 0x200, scoped, tag = 'prefetched SMEM operand 1']
  %s0 = inlined_call_operand.hbm [shape: s32[2], index: 0, kind: input, shape index: {}]
  %s1 = inlined_call_operand.vmem [shape: s32[2], index: 1, kind: input, shape index: {}]
  %s2 = inlined_call_operand.hbm [shape: f32[2,16,256], index: 2, kind: input, shape index: {}]
  %s3 = inlined_call_operand.hbm [shape: f32[2,16,256], index: 3, kind: output, shape index: {}]
  %s4 = sld [smem:[#allocation0]]
  $region41: #{tpu_custom_call.1} parent=0
    _
  %s6 = ssub.s32 1, %s4
  %s7 = scalar_select 0, %s6, %s4
  %9 = dma.hbm_to_smem %s0, 16, [#allocation3], [#allocation2]
  %s10 = sshll.u32 %s1, 4
  %s11 = int_to_ptr.vmem [resolvable:$true] %s10
  %13 = dma.vmem_to_smem %s11, 16, [#allocation4], [#allocation2]
  %14 = dma.done [#allocation2], 32
  %15 = sfence
  $region1: #{tpu_custom_call.1} parent=0
    #allocation5 [shape = 'u8[32768]{0}', space=vmem, size = 0x8000, scoped, tag = 'input window, operand 2']
    #allocation6 [shape = 's32[2]{0}', space=sflag, size = 0x8, scoped, tag = 'scoped memory for tpu_custom_call.1']
    #allocation7 [shape = 's32[2]{0}', space=sflag, size = 0x8, scoped, tag = 'scoped memory for tpu_custom_call.1']
    #allocation8 [shape = 'u8[32768]{0}', space=vmem, size = 0x8000, scoped, tag = 'output window, operand 0']
    %16 = vsyncpa [#allocation6], 0
    %s17 = scalar_lea.sflag [#allocation6], 1
    %18 = vsyncpa %s17, 0
    %19 = vsyncpa [#allocation7], 0
    %s20 = scalar_lea.sflag [#allocation7], 1
    %21 = vsyncpa %s20, 0
    loop: start=0, step=1, limit=4
    $region2: #{tpu_custom_call.1} parent=1 // loop_pre_header
      _
    $region3: #{tpu_custom_call.1} parent=1 // loop_header
      %s23 = sphi 0, %s27
      %p24 = scmp.ge.s32.totalorder %s23, 4
      %s30 = sphi 0, %s42
      %s31 = sphi 0, %s38
      %s32 = sphi 0, %s30
      %s33 = sphi 0, %s31
      %s34 = sphi 0, %s32
      %s35 = sphi 0, %s33
      %s49 = sphi 0, %s51
      %s52 = sphi 0, %s49
      %s53 = sphi 0, %s52
      %s69 = sphi 0, %s53
      %s77 = sphi 0, %s79
      %s80 = sphi 0, %s77
      %s81 = sphi 0, %s80
      %s97 = sphi 0, %s81
    $region4: #{tpu_custom_call.1} parent=1 // loop_header_branch
      %26 = sbr.rel (%p24) target = $region8
    $region5: #{tpu_custom_call.1} parent=1 // loop_body
      %s28 = ssub.s32 %s23, 1
      %s29 = ssub.s32 %s23, 2
      %s36 = sadd.s32 1, %s31
      %p37 = scmp.ge.s32.totalorder %s36, 2
      %s38 = scalar_select %p37, 0, %s36
      %s39 = sadd.s32 1, %s30
      %s40 = scalar_select %p37, %s39, %s30
      %p41 = scmp.ge.s32.totalorder %s40, 1
      %s42 = scalar_select %p41, 0, %s40
      %s43 = sld [smem:[#allocation3 + %s31]]
      %s44 = sld [smem:[#allocation3 + %s38]]
      %s45 = ssub.s32 %s30, %s42
      %s46 = ssub.s32 %s43, %s44
      %s47 = sor.u32 %s45, %s46
      %p48 = scmp.eq.s32.totalorder %s47, 0
      %s50 = sadd.s32 %s49, 1
      %s51 = scalar_select %p48, %s49, %s50
      %p54 = pneg %p48
      %p55 = scmp.eq.s32.totalorder %s23, 1
      %p56 = por %p54, %p55
      %p57 = scmp.ne.s32.totalorder %s49, %s52
      %p58 = scmp.eq.s32.totalorder %s23, 0
      %p59 = por %p57, %p58
      %p60 = scmp.ne.s32.totalorder %s49, %s52
      %p61 = scmp.eq.s32.totalorder %s28, 1
      %p62 = por %p60, %p61
      %p63 = scmp.ne.s32.totalorder %s52, %s53
      %p64 = scmp.eq.s32.totalorder %s28, 0
      %p65 = por %p63, %p64
      %p66 = scmp.ne.s32.totalorder %s52, %s53
      %p67 = scmp.eq.s32.totalorder %s29, 1
      %p68 = por %p66, %p67
      %p70 = scmp.ne.s32.totalorder %s53, %s69
      %p71 = scmp.eq.s32.totalorder %s29, 0
      %p72 = por %p70, %p71
      %s73 = ssub.s32 %s30, %s42
      %s74 = ssub.s32 %s31, %s38
      %s75 = sor.u32 %s73, %s74
      %p76 = scmp.eq.s32.totalorder %s75, 0
      %s78 = sadd.s32 %s77, 1
      %s79 = scalar_select %p76, %s77, %s78
      %p82 = pneg %p76
      %p83 = scmp.eq.s32.totalorder %s23, 1
      %p84 = por %p82, %p83
      %p85 = scmp.ne.s32.totalorder %s77, %s80
      %p86 = scmp.eq.s32.totalorder %s23, 0
      %p87 = por %p85, %p86
      %p88 = scmp.ne.s32.totalorder %s77, %s80
      %p89 = scmp.eq.s32.totalorder %s28, 1
      %p90 = por %p88, %p89
      %p91 = scmp.ne.s32.totalorder %s80, %s81
      %p92 = scmp.eq.s32.totalorder %s28, 0
      %p93 = por %p91, %p92
      %p94 = scmp.ne.s32.totalorder %s80, %s81
      %p95 = scmp.eq.s32.totalorder %s29, 1
      %p96 = por %p94, %p95
      %p98 = scmp.ne.s32.totalorder %s81, %s97
      %p99 = scmp.eq.s32.totalorder %s29, 0
      %p100 = por %p98, %p99
      %p101 = scmp.le.s32.totalorder 1, %s23
      %p102 = scmp.lt.s32.totalorder %s23, 3
      %p103 = pnand %p101, %p102
      %p104 = pneg %p103
      // Predicated region
      $region9: #{tpu_custom_call.1} parent=5 // pred_check
        _
      $region10: #{tpu_custom_call.1} parent=5 // pred_check_branch
        %106 = sbr.rel (%p103) target = $region12
      $region11: #{tpu_custom_call.1} parent=5 // pred_region
        %s107 = ssub.s32 %s23, 1
      $region12: #{tpu_custom_call.1} parent=5 // pred_fallthru
        _
      %p108 = scmp.lt.s32.totalorder %s23, 2
      // Predicated region
      $region13: #{tpu_custom_call.1} parent=5 // pred_check
        %p109 = pneg %p108
      $region14: #{tpu_custom_call.1} parent=5 // pred_check_branch
        %111 = sbr.rel (%p109) target = $region16
      $region15: #{tpu_custom_call.1} parent=5 // pred_region
        // Predicated region
        $region17: #{tpu_custom_call.1} parent=15 // pred_check
          %p112 = pneg %p59
        $region18: #{tpu_custom_call.1} parent=15 // pred_check_branch
          %114 = sbr.rel (%p112) target = $region20
        $region19: #{tpu_custom_call.1} parent=15 // pred_region
          %s115 = sand.u32 %s49, 1
          %s116 = scalar_lea.sflag [#allocation6], %s115
          %s117 = sand.u32 %s49, 1
          %s118 = smul.addr %s117, 32
          %s119 = scalar_lea.vmem [#allocation5], %s118
          %s120 = sld [smem:[#allocation3 + %s31]]
          %s121 = smul.u32 2, %s30
          %s123 = ssub.s32 512, 512
          %124 = vsyncadd %s116, %s123
          %s125 = smul.addr %s120, 2
          %s126 = smul.addr %s121, 4
          %s127 = sadd.s32 %s125, %s126
          %s128 = smul.addr %s127, 128
          %s129 = scalar_lea.hbm %s2, %s128
          %s130 = sshll.u32 %s119, 4
          %s131 = int_to_ptr.vmem [resolvable:$true] %s130
          %136 = dma.hbm_to_vmem [thread:$0]  %s129, 512, %s131, %s116, 512, 256, 16
        $region20: #{tpu_custom_call.1} parent=15 // pred_fallthru
          _
      $region16: #{tpu_custom_call.1} parent=5 // pred_fallthru
        _
      %p137 = scmp.le.s32.totalorder 1, %s23
      %p138 = scmp.lt.s32.totalorder %s23, 3
      %p139 = pnand %p137, %p138
      %p140 = pneg %p139
      // Predicated region
      $region21: #{tpu_custom_call.1} parent=5 // pred_check
        _
      $region22: #{tpu_custom_call.1} parent=5 // pred_check_branch
        %142 = sbr.rel (%p139) target = $region24
      $region23: #{tpu_custom_call.1} parent=5 // pred_region
        %s143 = ssub.s32 %s23, 1
        %s144 = sand.u32 %s52, 1
        %s145 = scalar_lea.sflag [#allocation6], %s144
        %s146 = sand.u32 %s52, 1
        %s147 = smul.addr %s146, 32
        %s148 = scalar_lea.vmem [#allocation5], %s147
        // Predicated region
        $region25: #{tpu_custom_call.1} parent=23 // pred_check
          %p149 = pneg %p65
        $region26: #{tpu_custom_call.1} parent=23 // pred_check_branch
          %151 = sbr.rel (%p149) target = $region28
        $region27: #{tpu_custom_call.1} parent=23 // pred_region
          %152 = dma.done %s145, 512
        $region28: #{tpu_custom_call.1} parent=23 // pred_fallthru
          _
        %s153 = sand.u32 %s52, 1
        %s154 = scalar_lea.sflag [#allocation6], %s153
        %s155 = sand.u32 %s52, 1
        %s156 = smul.addr %s155, 32
        %s157 = scalar_lea.vmem [#allocation5], %s156
        %p158 = pneg %p65
        %p159 = pneg %p62
        %p160 = pneg %p93
        %p161 = pneg %p90
        %s162 = sand.u32 %s80, 1
        %s163 = scalar_lea.sflag [#allocation7], %s162
        %s164 = sand.u32 %s80, 1
        %s165 = smul.addr %s164, 32
        %s166 = scalar_lea.vmem [#allocation8], %s165
        %s167 = sld [smem:[#allocation3 + %s33]]
        %s168 = smul.u32 2, %s32
        %s169 = smul.u32 2, %s32
        %s170 = sld [smem:[#allocation4]]
        %s171 = smul.u32 %s170, 128
        %s172 = sshra.s32 %s171, 7
        %s173 = sand.u32 %s171, 127
        %s174 = smul.addr %s172, 8
        %s175 = scalar_lea.vmem %s148, %s174 [#allocation5]
        %v176 = vld [vmem:[%s175] sm:$0xff]
        %v177 = vld [vmem:[%s175 + $0x10] sm:$0xff]
        %178 = vst [vmem:[%s166] sm:$0xff] %v176
        %179 = vst [vmem:[%s166 + $0x10] sm:$0xff] %v177
        %s180 = sld [smem:[#allocation4 + $0x1]]
        %s181 = smul.u32 %s180, 128
        %s182 = sshra.s32 %s181, 7
        %s183 = sand.u32 %s181, 127
        %s184 = smul.addr %s182, 8
        %s185 = scalar_lea.vmem %s148, %s184 [#allocation5]
        %v186 = vld [vmem:[%s185] sm:$0xff]
        %v187 = vld [vmem:[%s185 + $0x10] sm:$0xff]
        %188 = vst [vmem:[%s166 + $0x8] sm:$0xff] %v186
        %189 = vst [vmem:[%s166 + $0x18] sm:$0xff] %v187
        %s190 = sand.u32 %s80, 1
        %s191 = scalar_lea.sflag [#allocation7], %s190
        %s192 = sand.u32 %s80, 1
        %s193 = smul.addr %s192, 32
        %s194 = scalar_lea.vmem [#allocation8], %s193
        // Predicated region
        $region29: #{tpu_custom_call.1} parent=23 // pred_check
          %p195 = pneg %p90
        $region30: #{tpu_custom_call.1} parent=23 // pred_check_branch
          %197 = sbr.rel (%p195) target = $region32
        $region31: #{tpu_custom_call.1} parent=23 // pred_region
          %s198 = smul.u32 2, %s32
          %s200 = ssub.s32 512, 512
          %201 = vsyncadd %s191, %s200
          %s202 = smul.addr %s33, 2
          %s203 = smul.addr %s198, 4
          %s204 = sadd.s32 %s202, %s203
          %s205 = smul.addr %s204, 128
          %s206 = scalar_lea.hbm %s3, %s205
          %s207 = sshll.u32 %s194, 4
          %s208 = int_to_ptr.vmem [resolvable:$true] %s207
          %213 = dma.vmem_to_hbm [thread:$0]  %s208, 512, %s206, %s191, 256, 512, 16
        $region32: #{tpu_custom_call.1} parent=23 // pred_fallthru
          _
      $region24: #{tpu_custom_call.1} parent=5 // pred_fallthru
        _
      %p214 = scmp.le.s32.totalorder 2, %s23
      // Predicated region
      $region33: #{tpu_custom_call.1} parent=5 // pred_check
        %p215 = pneg %p214
      $region34: #{tpu_custom_call.1} parent=5 // pred_check_branch
        %217 = sbr.rel (%p215) target = $region36
      $region35: #{tpu_custom_call.1} parent=5 // pred_region
        %s218 = ssub.s32 %s23, 2
        // Predicated region
        $region37: #{tpu_custom_call.1} parent=35 // pred_check
          %p219 = pneg %p96
        $region38: #{tpu_custom_call.1} parent=35 // pred_check_branch
          %221 = sbr.rel (%p219) target = $region40
        $region39: #{tpu_custom_call.1} parent=35 // pred_region
          %s222 = sand.u32 %s81, 1
          %s223 = scalar_lea.sflag [#allocation7], %s222
          %s224 = sand.u32 %s81, 1
          %s225 = smul.addr %s224, 32
          %s226 = scalar_lea.vmem [#allocation8], %s225
          %227 = dma.done %s223, 512
        $region40: #{tpu_custom_call.1} parent=35 // pred_fallthru
          _
      $region36: #{tpu_custom_call.1} parent=5 // pred_fallthru
        _
    $region6: #{tpu_custom_call.1} parent=1 // loop_footer
      %s27 = sadd.s32 1, %s23
    $region7: #{tpu_custom_call.1} parent=1 // loop_footer_branch
      %22 = sbr.rel target = $region3
    $region8: #{tpu_custom_call.1} parent=1 // loop_exit
      _
    %228 = vsyncpa [#allocation6], 1
    %s229 = scalar_lea.sflag [#allocation6], 1
    %230 = vsyncpa %s229, 1
    %231 = vsyncpa [#allocation7], 1
    %s232 = scalar_lea.sflag [#allocation7], 1
    %233 = vsyncpa %s232, 1

</llo_original>
